<compile_context>
chip_gen: v7x
topology: tpu7x:2x2x1
jax: 0.10.0
libtpu: 0.0.40
codegen_flags: <defaults>
</compile_context>

<pallas_src>
import functools

import numpy as np
import jax
import jax.numpy as jnp
from jax.experimental import pallas as pl
from jax.experimental.pallas import tpu as pltpu


def _round_up(a, m):
    return (a + m - 1) // m * m


def _vmem_limit_bytes():
    """Generation-aware VMEM budget (~75% of per-core physical, capped)."""
    try:
        cap = int(pltpu.get_tpu_info().vmem_capacity_bytes)
    except Exception:
        cap = 64 << 20          # conservative fallback (v7x: 64 MiB / TC)
    return max(16 << 20, min(cap * 3 // 4, 100 << 20))


# ----------------------------------------------------------------------------
# Pallas kernel
# ----------------------------------------------------------------------------
def _diff_loss_kernel(starts_sm, ends_sm, x_ref, w_ref, b_ref, out_ref, acc_ref,
                      *, neg_samples, channels):
    """Per-(batch-element, time-chunk) step.

    starts_sm : (B*S,) int32 SMEM   window start (inclusive), S = 2+neg_samples
    ends_sm   : (B*S,) int32 SMEM   window end   (exclusive)
    x_ref     : (1, (1+K)*C, TL)    packed [batch | neg_1 ... neg_K] time chunk
    w_ref     : (C, D)              stand-in encoder linear weight (resident)
    b_ref     : (1, D)              stand-in encoder linear bias   (resident)
    out_ref   : (1, 1, 1) f32       per-example loss (written at last chunk)
    acc_ref   : (S, C) f32 VMEM     masked-sum accumulator
    """
    K = neg_samples
    S = 2 + K
    C = channels
    b = pl.program_id(0)          # batch element ("parallel")
    k = pl.program_id(1)          # time-chunk index (trailing, "arbitrary")
    n_k = pl.num_programs(1)
    tl = x_ref.shape[-1]          # chunk length (static)

    @pl.when(k == 0)
    def _init():
        acc_ref[...] = jnp.zeros_like(acc_ref)

    # ---- per-segment windows from SMEM scalars (no per-step param DMA) ------
    start = jnp.concatenate(
        [jnp.full((1, 1), starts_sm[b * S + s], jnp.int32) for s in range(S)],
        axis=0)                                               # (S, 1)
    end = jnp.concatenate(
        [jnp.full((1, 1), ends_sm[b * S + s], jnp.int32) for s in range(S)],
        axis=0)                                               # (S, 1)

    t = jax.lax.broadcasted_iota(jnp.int32, (S, tl), 1) + k * tl
    win = (t >= start) & (t < end)                            # (S, tl) bool

    # ---- gather segment views of the packed chunk (batch row streamed once) -
    xb = x_ref[0]                                             # ((1+K)*C, TL)
    x0 = xb[0:C, :]                                           # batch series
    segs = [x0, x0] + [xb[(1 + i) * C:(2 + i) * C, :] for i in range(K)]
    xg = jnp.stack(segs, axis=0).astype(jnp.float32)          # (S, C, TL)

    # ---- NaN-safe masked partial sums, accumulated in f32 -------------------
    xm = jnp.where(win[:, None, :], xg, 0.0)                  # select, not mul
    acc_ref[...] += jnp.sum(xm, axis=-1)                      # (S, C)

    # ---- finalize: masked mean + encoder matmul + contrastive loss ----------
    @pl.when(k == n_k - 1)
    def _finalize():
        lens = (end - start).astype(jnp.float32)              # (S, 1)
        pooled = acc_ref[...] / lens                          # (S, C) mean-pool
        # TODO(synk): with a real (large C, D) encoder, emit `pooled` as the
        # kernel output and run one batched (B*S, C) x (C, D) matmul outside
        # for full MXU occupancy; the stand-in matmul here is negligible.
        z = jnp.dot(pooled, w_ref[...].astype(jnp.float32),
                    preferred_element_type=jnp.float32)
        z = z + b_ref[...].astype(jnp.float32)                # (S, D)

        anchor = z[0:1, :]                                    # (1, D)
        pos = jnp.sum(anchor * z[1:2, :], axis=-1, keepdims=True)   # (1, 1)

        m_run = pos
        negs = []
        for i in range(K):                                    # static unroll
            nl = jnp.sum(anchor * z[2 + i:3 + i, :], axis=-1, keepdims=True)
            negs.append(nl)
            m_run = jnp.maximum(m_run, nl)

        se = jnp.exp(pos - m_run)
        for nl in negs:
            se = se + jnp.exp(nl - m_run)
        lse = m_run + jnp.log(se)                             # (1, 1)

        # -LogSoftmax(dim=1)[:, 0]  ==  lse - pos_logit
        out_ref[...] = jnp.reshape(lse - pos, (1, 1, 1))


# ----------------------------------------------------------------------------
# Host glue: sampling (varying=True branch) + input packing + tile sizing
# ----------------------------------------------------------------------------
def _prepare_inputs(train, batch, *, neg_samples=1, compared_length=None,
                    seed=0, tile_l=None, store_dtype=None,
                    stream_budget_bytes=None):
    """Reproduces the varying=True sampling and packs lane-dense kernel inputs."""
    if compared_length is None:
        compared_length = np.inf
    train_np = np.asarray(train)
    batch_np = np.asarray(batch)
    B, C, L = batch_np.shape
    T = train_np.shape[0]
    K = neg_samples
    S = 2 + K                    # anchor, positive, K negatives (segments)
    R = 1 + K                    # distinct source series streamed from HBM
    max_length = L

    rng = np.random.RandomState(seed)   # deterministic stand-in for np.random.*
    samples = rng.choice(T, size=(K, B))

    # TODO(synk): NaN-padded variable-length series are not modeled on the host
    # side; inputs here are dense, so lengths_* == max_length.  (The kernel's
    # masked select is NaN-safe for padding outside the sampled windows.)
    lengths_batch = np.full(B, max_length, dtype=int)
    lengths_samples = np.full((K, B), max_length, dtype=int)

    lengths_pos = np.empty(B, dtype=int)
    lengths_neg = np.empty((K, B), dtype=int)
    for j in range(B):
        lengths_pos[j] = rng.randint(1, int(min(compared_length, lengths_batch[j])) + 1)
        for i in range(K):
            lengths_neg[i, j] = rng.randint(
                1, int(min(compared_length, lengths_samples[i, j])) + 1)

    length_selected = np.array([
        rng.randint(lengths_pos[j], int(min(compared_length, lengths_batch[j])) + 1)
        for j in range(B)])
    start_ind_selected = np.array([
        rng.randint(0, lengths_batch[j] - length_selected[j] + 1) for j in range(B)])
    start_ind_pos = np.array([
        rng.randint(0, length_selected[j] - lengths_pos[j] + 1) for j in range(B)])
    start_pos = start_ind_selected + start_ind_pos
    start_ind_neg = np.array([[
        rng.randint(0, lengths_samples[i, j] - lengths_neg[i, j] + 1)
        for j in range(B)] for i in range(K)])

    # ---- storage dtype (optional bf16 halves the dominant HBM stream) -------
    if store_dtype is None:
        store_dtype = batch_np.dtype
    itemsize = np.dtype(store_dtype).itemsize

    # ---- generation-aware tile sizing ---------------------------------------
    if stream_budget_bytes is None:
        stream_budget_bytes = max(4 << 20, _vmem_limit_bytes() - (8 << 20))
    RC = R * C
    row_tile = 8 * max(1, 4 // max(1, itemsize))       # 8 rows f32, 16 rows bf16
    rows_pad = _round_up(RC, row_tile)
    bytes_per_128 = 2 * rows_pad * 128 * itemsize      # double-buffered x stream
    max_blocks = max(1, int(stream_budget_bytes // max(1, bytes_per_128)))
    L128 = _round_up(L, 128)
    nblk = L128 // 128
    if tile_l is None:
        # largest 128-multiple divisor of round_up(L,128) that fits the budget
        d = 1
        for cand in range(1, nblk + 1):
            if nblk % cand == 0 and cand <= max_blocks:
                d = cand
        tile_l = 128 * d
        Lpad = L128
    else:
        tile_l = int(max(128, _round_up(int(tile_l), 128)))
        tile_l = int(min(tile_l, L128))
        Lpad = _round_up(L, tile_l)

    # ---- packed, sublane-dense slab: (B, (1+K)*C, Lpad) ----------------------
    # source row-block 0 = the batch series (shared by anchor AND positive),
    # row-blocks 1..K   = the sampled negatives.
    x3 = np.zeros((B, RC, Lpad), dtype=np.float32)
    x3[:, 0:C, :L] = batch_np
    for i in range(K):
        x3[:, (1 + i) * C:(2 + i) * C, :L] = train_np[samples[i]]

    starts = np.zeros((B, S), dtype=np.int32)
    ends = np.zeros((B, S), dtype=np.int32)
    starts[:, 0] = start_ind_selected
    ends[:, 0] = start_ind_selected + length_selected
    starts[:, 1] = start_pos
    ends[:, 1] = start_pos + lengths_pos
    for i in range(K):
        starts[:, 2 + i] = start_ind_neg[i]
        ends[:, 2 + i] = start_ind_neg[i] + lengths_neg[i]

    x3_j = jnp.asarray(x3).astype(store_dtype)
    return (x3_j,
            jnp.asarray(starts.reshape(-1)),     # (B*S,) int32 -> SMEM prefetch
            jnp.asarray(ends.reshape(-1)),       # (B*S,) int32 -> SMEM prefetch
            int(tile_l))


# ----------------------------------------------------------------------------
# pallas_call wrapper
# ----------------------------------------------------------------------------
def _diff_loss_pallas(x3, starts_flat, ends_flat, enc_w, enc_b, *,
                      neg_samples, channels, tile_l):
    B, RC, Lpad = x3.shape
    K = neg_samples
    S = 2 + K
    C = channels
    assert RC == (1 + K) * C
    D = enc_w.shape[1]
    n_chunks = Lpad // tile_l

    kernel = functools.partial(_diff_loss_kernel, neg_samples=K, channels=C)

    flops = int(3 * B * S * C * Lpad            # masked pooling stream
                + 2 * B * S * C * D             # stand-in encoder matmul
                + 2 * B * (K + 1) * D)          # contrastive dot products
    bytes_accessed = int(x3.size * x3.dtype.itemsize
                         + enc_w.size * enc_w.dtype.itemsize
                         + enc_b.size * enc_b.dtype.itemsize
                         + 2 * B * S * 4 + B * 4)

    # TODO(synk): for B == 1 on v7x (2 TensorCores) the "parallel" batch axis
    # leaves one core idle; that case needs a leading parallel split of the
    # time axis with partial pooled-sum outputs combined in the wrapper.
    grid_spec = pltpu.PrefetchScalarGridSpec(
        num_scalar_prefetch=2,                  # starts, ends -> SMEM
        grid=(B, n_chunks),
        in_specs=[
            # streamed, lane-dense, sublane-dense time chunks of the packed slab
            pl.BlockSpec((1, RC, tile_l), lambda b, k, st, en: (b, 0, k)),
            # stand-in encoder parameters, resident across the whole grid
            pl.BlockSpec((C, D), lambda b, k, st, en: (0, 0)),
            pl.BlockSpec((1, D), lambda b, k, st, en: (0, 0)),
        ],
        out_specs=pl.BlockSpec((1, 1, 1), lambda b, k, st, en: (b, 0, 0)),
        scratch_shapes=[pltpu.VMEM((S, C), jnp.float32)],
    )

    per_example = pl.pallas_call(
        kernel,
        out_shape=jax.ShapeDtypeStruct((B, 1, 1), jnp.float32),
        grid_spec=grid_spec,
        compiler_params=pltpu.CompilerParams(
            dimension_semantics=("parallel", "arbitrary"),
            vmem_limit_bytes=_vmem_limit_bytes()),
        cost_estimate=pl.CostEstimate(
            flops=flops,
            transcendentals=int(B * (K + 2)),
            bytes_accessed=bytes_accessed),
    )(starts_flat, ends_flat, x3, enc_w, enc_b)

    # tiny cross-example mean done outside the kernel (keeps the batch axis
    # "parallel"-shardable across TensorCores)
    return jnp.sum(per_example) / B


def diff_loss_forward(train, batch, enc_w, enc_b, *, neg_samples=1,
                      compared_length=None, seed=0, tile_l=None,
                      store_dtype=None):
    """Module-equivalent forward (varying=True branch, stand-in encoder)."""
    C = int(np.asarray(batch).shape[1])
    x3, starts_flat, ends_flat, tl = _prepare_inputs(
        train, batch, neg_samples=neg_samples,
        compared_length=compared_length, seed=seed, tile_l=tile_l,
        store_dtype=store_dtype)
    return _diff_loss_pallas(x3, starts_flat, ends_flat, enc_w, enc_b,
                             neg_samples=neg_samples, channels=C, tile_l=tl)


# ----------------------------------------------------------------------------
# Pure-JAX reference (same math, same sampled windows) for a sanity check
# ----------------------------------------------------------------------------
def _reference_loss(x3, starts_flat, ends_flat, enc_w, enc_b, *,
                    neg_samples, channels):
    K = neg_samples
    S = 2 + K
    R = 1 + K
    C = channels
    B, RC, Lp = x3.shape
    x = x3.astype(jnp.float32).reshape(B, R, C, Lp)
    xg = jnp.concatenate([x[:, 0:1], x], axis=1)               # (B, S, C, Lp)
    st = starts_flat.reshape(B, S)[..., None]                   # (B, S, 1)
    en = ends_flat.reshape(B, S)[..., None]
    t = jnp.arange(Lp, dtype=jnp.int32)[None, None, :]
    mask = ((t >= st) & (t < en)).astype(jnp.float32)           # (B, S, Lp)
    pooled = jnp.einsum('bscl,bsl->bsc', xg, mask) / (en - st).astype(jnp.float32)
    z = pooled @ enc_w.astype(jnp.float32) + enc_b.astype(jnp.float32)
    anchor = z[:, 0]
    pos = jnp.sum(anchor * z[:, 1], axis=-1, keepdims=True)     # (B, 1)
    negs = jnp.stack([jnp.sum(anchor * z[:, 2 + i], axis=-1)
                      for i in range(K)], axis=1)               # (B, K)
    logits = jnp.concatenate([pos, negs], axis=1)
    loss = -jax.nn.log_softmax(logits, axis=1)[:, 0]
    return jnp.sum(loss) / B


if __name__ == "__main__":
    key = jax.random.PRNGKey(0)
    B, C, L = 2, 4, 256      # batch, channels, time (L > 128 to exercise tiling)
    T = 6                    # train pool size
    D = 32                   # stand-in encoder embedding dim
    K = 2                    # neg_samples

    k1, k2, k3, k4 = jax.random.split(key, 4)
    train = jax.random.normal(k1, (T, C, L), jnp.float32)
    batch = jax.random.normal(k2, (B, C, L), jnp.float32)
    enc_w = 0.1 * jax.random.normal(k3, (C, D), jnp.float32)
    enc_b = 0.01 * jax.random.normal(k4, (1, D), jnp.float32)

    # force tile_l=128 so the demo exercises the multi-chunk accumulator path
    loss = diff_loss_forward(train, batch, enc_w, enc_b,
                             neg_samples=K, compared_length=None, seed=0,
                             tile_l=128)
    loss = jax.block_until_ready(loss)
    assert jnp.isfinite(loss), "loss is not finite"

    # correctness check against pure-JAX math on the same deterministic windows
    x3, s_f, e_f, _ = _prepare_inputs(
        train, batch, neg_samples=K, compared_length=None, seed=0, tile_l=128)
    ref = _reference_loss(x3, s_f, e_f, enc_w, enc_b, neg_samples=K, channels=C)
    np.testing.assert_allclose(np.asarray(loss), np.asarray(ref),
                               rtol=1e-4, atol=1e-4)

    print("KERNEL_OK")
</pallas_src>

<mosaic_0001>
module attributes {stable_mosaic.version = 11 : i64} {
  func.func @_diff_loss_kernel(%arg0: i32, %arg1: i32, %arg2: memref<8xi32, #tpu.memory_space<smem>>, %arg3: memref<8xi32, #tpu.memory_space<smem>>, %arg4: memref<1x12x128xf32, #tpu.memory_space<vmem>>, %arg5: memref<4x32xf32, #tpu.memory_space<vmem>>, %arg6: memref<1x32xf32, #tpu.memory_space<vmem>>, %arg7: memref<1x1x1xf32, #tpu.memory_space<vmem>>, %arg8: memref<4x4xf32, #tpu.memory_space<vmem>>) attributes {dimension_semantics = [#tpu.dimension_semantics<parallel>, #tpu.dimension_semantics<arbitrary>], iteration_bounds = array<i64: 2, 2>, scalar_prefetch = 2 : i64, scratch_operands = 1 : i64, tpu.core_type = #tpu.core_type<tc>, window_params = [{transform_indices = @transform_0, window_bounds = array<i64: 1, 12, 128>}, {pipeline_mode = #tpu.pipeline_mode<synchronous>, transform_indices = @transform_1, window_bounds = array<i64: 4, 32>}, {pipeline_mode = #tpu.pipeline_mode<synchronous>, transform_indices = @transform_2, window_bounds = array<i64: 1, 32>}, {transform_indices = @transform_3, window_bounds = array<i64: 1, 1, 1>}]} {
    %c0_i32 = arith.constant 0 : i32
    %0 = arith.cmpi eq, %arg1, %c0_i32 : i32
    %1 = arith.extui %0 : i1 to i32
    %c0_i32_0 = arith.constant 0 : i32
    %2 = arith.cmpi ne, %1, %c0_i32_0 : i32
    scf.if %2 {
      %cst_22 = arith.constant 0.000000e+00 : f32
      %76 = vector.broadcast %cst_22 : f32 to vector<4x4xf32>
      %c0_23 = arith.constant 0 : index
      %c0_24 = arith.constant 0 : index
      %77 = vector.load %arg8[%c0_23, %c0_24] : memref<4x4xf32, #tpu.memory_space<vmem>>, vector<4x4xf32>
      tpu.vector_store %arg8[%c0_23, %c0_24], %76 {strides = array<i32>} : memref<4x4xf32, #tpu.memory_space<vmem>>, vector<4x4xf32>,
    } else {
    }
    %c4_i32 = arith.constant 4 : i32
    %3 = arith.muli %arg0, %c4_i32 : i32
    %c0_i32_1 = arith.constant 0 : i32
    %4 = arith.addi %3, %c0_i32_1 : i32
    %5 = arith.index_cast %4 : i32 to index
    %6 = memref.load %arg2[%5] : memref<8xi32, #tpu.memory_space<smem>>
    %7 = vector.broadcast %6 : i32 to vector<1x1xi32>
    %c4_i32_2 = arith.constant 4 : i32
    %8 = arith.muli %arg0, %c4_i32_2 : i32
    %c1_i32 = arith.constant 1 : i32
    %9 = arith.addi %8, %c1_i32 : i32
    %10 = arith.index_cast %9 : i32 to index
    %11 = memref.load %arg2[%10] : memref<8xi32, #tpu.memory_space<smem>>
    %12 = vector.broadcast %11 : i32 to vector<1x1xi32>
    %c4_i32_3 = arith.constant 4 : i32
    %13 = arith.muli %arg0, %c4_i32_3 : i32
    %c2_i32 = arith.constant 2 : i32
    %14 = arith.addi %13, %c2_i32 : i32
    %15 = arith.index_cast %14 : i32 to index
    %16 = memref.load %arg2[%15] : memref<8xi32, #tpu.memory_space<smem>>
    %17 = vector.broadcast %16 : i32 to vector<1x1xi32>
    %c4_i32_4 = arith.constant 4 : i32
    %18 = arith.muli %arg0, %c4_i32_4 : i32
    %c3_i32 = arith.constant 3 : i32
    %19 = arith.addi %18, %c3_i32 : i32
    %20 = arith.index_cast %19 : i32 to index
    %21 = memref.load %arg2[%20] : memref<8xi32, #tpu.memory_space<smem>>
    %22 = vector.broadcast %21 : i32 to vector<1x1xi32>
    %23 = tpu.concatenate %7, %12, %17, %22 in 0 : vector<1x1xi32>, vector<1x1xi32>, vector<1x1xi32>, vector<1x1xi32> -> vector<4x1xi32>
    %c4_i32_5 = arith.constant 4 : i32
    %24 = arith.muli %arg0, %c4_i32_5 : i32
    %c0_i32_6 = arith.constant 0 : i32
    %25 = arith.addi %24, %c0_i32_6 : i32
    %26 = arith.index_cast %25 : i32 to index
    %27 = memref.load %arg3[%26] : memref<8xi32, #tpu.memory_space<smem>>
    %28 = vector.broadcast %27 : i32 to vector<1x1xi32>
    %c4_i32_7 = arith.constant 4 : i32
    %29 = arith.muli %arg0, %c4_i32_7 : i32
    %c1_i32_8 = arith.constant 1 : i32
    %30 = arith.addi %29, %c1_i32_8 : i32
    %31 = arith.index_cast %30 : i32 to index
    %32 = memref.load %arg3[%31] : memref<8xi32, #tpu.memory_space<smem>>
    %33 = vector.broadcast %32 : i32 to vector<1x1xi32>
    %c4_i32_9 = arith.constant 4 : i32
    %34 = arith.muli %arg0, %c4_i32_9 : i32
    %c2_i32_10 = arith.constant 2 : i32
    %35 = arith.addi %34, %c2_i32_10 : i32
    %36 = arith.index_cast %35 : i32 to index
    %37 = memref.load %arg3[%36] : memref<8xi32, #tpu.memory_space<smem>>
    %38 = vector.broadcast %37 : i32 to vector<1x1xi32>
    %c4_i32_11 = arith.constant 4 : i32
    %39 = arith.muli %arg0, %c4_i32_11 : i32
    %c3_i32_12 = arith.constant 3 : i32
    %40 = arith.addi %39, %c3_i32_12 : i32
    %41 = arith.index_cast %40 : i32 to index
    %42 = memref.load %arg3[%41] : memref<8xi32, #tpu.memory_space<smem>>
    %43 = vector.broadcast %42 : i32 to vector<1x1xi32>
    %44 = tpu.concatenate %28, %33, %38, %43 in 0 : vector<1x1xi32>, vector<1x1xi32>, vector<1x1xi32>, vector<1x1xi32> -> vector<4x1xi32>
    %45 = tpu.iota {dimensions = array<i32: 1>} : vector<4x128xi32>
    %c128_i32 = arith.constant 128 : i32
    %46 = arith.muli %arg1, %c128_i32 : i32
    %47 = vector.broadcast %46 : i32 to vector<4x128xi32>
    %48 = arith.addi %45, %47 : vector<4x128xi32>
    %49 = vector.broadcast %23 : vector<4x1xi32> to vector<4x128xi32>
    %50 = arith.cmpi sge, %48, %49 : vector<4x128xi32>
    %51 = vector.broadcast %44 : vector<4x1xi32> to vector<4x128xi32>
    %52 = arith.cmpi slt, %48, %51 : vector<4x128xi32>
    %53 = arith.andi %50, %52 : vector<4x128xi1>
    %c0 = arith.constant 0 : index
    %c0_13 = arith.constant 0 : index
    %c0_14 = arith.constant 0 : index
    %54 = vector.load %arg4[%c0, %c0_13, %c0_14] : memref<1x12x128xf32, #tpu.memory_space<vmem>>, vector<1x12x128xf32>
    %55 = vector.shape_cast %54 : vector<1x12x128xf32> to vector<12x128xf32>
    %56 = vector.extract_strided_slice %55 {offsets = [0, 0], sizes = [4, 128], strides = [1, 1]} : vector<12x128xf32> to vector<4x128xf32>
    %57 = vector.extract_strided_slice %55 {offsets = [4, 0], sizes = [4, 128], strides = [1, 1]} : vector<12x128xf32> to vector<4x128xf32>
    %58 = vector.extract_strided_slice %55 {offsets = [8, 0], sizes = [4, 128], strides = [1, 1]} : vector<12x128xf32> to vector<4x128xf32>
    %59 = vector.shape_cast %56 : vector<4x128xf32> to vector<1x4x128xf32>
    %60 = vector.shape_cast %56 : vector<4x128xf32> to vector<1x4x128xf32>
    %61 = vector.shape_cast %57 : vector<4x128xf32> to vector<1x4x128xf32>
    %62 = vector.shape_cast %58 : vector<4x128xf32> to vector<1x4x128xf32>
    %63 = tpu.concatenate %59, %60, %61, %62 in 0 : vector<1x4x128xf32>, vector<1x4x128xf32>, vector<1x4x128xf32>, vector<1x4x128xf32> -> vector<4x4x128xf32>
    %64 = vector.shape_cast %53 : vector<4x128xi1> to vector<4x1x128xi1>
    %cst = arith.constant 0.000000e+00 : f32
    %65 = vector.shape_cast %64 : vector<4x1x128xi1> to vector<4x1x128xi1>
    %66 = vector.broadcast %65 : vector<4x1x128xi1> to vector<4x4x128xi1>
    %67 = vector.broadcast %cst : f32 to vector<4x4x128xf32>
    %68 = arith.select %66, %63, %67 : vector<4x4x128xi1>, vector<4x4x128xf32>
    %c0_15 = arith.constant 0 : index
    %c0_16 = arith.constant 0 : index
    %69 = vector.load %arg8[%c0_15, %c0_16] : memref<4x4xf32, #tpu.memory_space<vmem>>, vector<4x4xf32>
    %cst_17 = arith.constant dense<0.000000e+00> : vector<4x4xf32>
    %70 = vector.multi_reduction <add>, %68, %cst_17 [2] : vector<4x4x128xf32> to vector<4x4xf32>
    %71 = arith.addf %69, %70 : vector<4x4xf32>
    %c0_18 = arith.constant 0 : index
    %c0_19 = arith.constant 0 : index
    %72 = vector.load %arg8[%c0_18, %c0_19] : memref<4x4xf32, #tpu.memory_space<vmem>>, vector<4x4xf32>
    tpu.vector_store %arg8[%c0_18, %c0_19], %71 {strides = array<i32>} : memref<4x4xf32, #tpu.memory_space<vmem>>, vector<4x4xf32>,
    %c1_i32_20 = arith.constant 1 : i32
    %73 = arith.cmpi eq, %arg1, %c1_i32_20 : i32
    %74 = arith.extui %73 : i1 to i32
    %c0_i32_21 = arith.constant 0 : i32
    %75 = arith.cmpi ne, %74, %c0_i32_21 : i32
    scf.if %75 {
      %76 = arith.subi %44, %23 : vector<4x1xi32>
      %77 = arith.sitofp %76 : vector<4x1xi32> to vector<4x1xf32>
      %c0_22 = arith.constant 0 : index
      %c0_23 = arith.constant 0 : index
      %78 = vector.load %arg8[%c0_22, %c0_23] : memref<4x4xf32, #tpu.memory_space<vmem>>, vector<4x4xf32>
      %79 = vector.broadcast %77 : vector<4x1xf32> to vector<4x4xf32>
      %80 = arith.divf %78, %79 : vector<4x4xf32>
      %c0_24 = arith.constant 0 : index
      %c0_25 = arith.constant 0 : index
      %81 = vector.load %arg5[%c0_24, %c0_25] : memref<4x32xf32, #tpu.memory_space<vmem>>, vector<4x32xf32>
      %cst_26 = arith.constant dense<0.000000e+00> : vector<4x32xf32>
      %82 = tpu.matmul %80, %81, %cst_26 {dimension_numbers = #tpu.dot_dimension_numbers<[1], [0], [0], [1], [0, 0, 1, 1], [], []>} : vector<4x4xf32>, vector<4x32xf32>, vector<4x32xf32> -> vector<4x32xf32>
      %c0_27 = arith.constant 0 : index
      %c0_28 = arith.constant 0 : index
      %83 = vector.load %arg6[%c0_27, %c0_28] : memref<1x32xf32, #tpu.memory_space<vmem>>, vector<1x32xf32>
      %84 = vector.broadcast %83 : vector<1x32xf32> to vector<4x32xf32>
      %85 = arith.addf %82, %84 : vector<4x32xf32>
      %86 = vector.extract_strided_slice %85 {offsets = [0, 0], sizes = [1, 32], strides = [1, 1]} : vector<4x32xf32> to vector<1x32xf32>
      %87 = vector.extract_strided_slice %85 {offsets = [1, 0], sizes = [1, 32], strides = [1, 1]} : vector<4x32xf32> to vector<1x32xf32>
      %88 = arith.mulf %86, %87 : vector<1x32xf32>
      %cst_29 = arith.constant dense<0.000000e+00> : vector<1xf32>
      %89 = vector.multi_reduction <add>, %88, %cst_29 [1] : vector<1x32xf32> to vector<1xf32>
      %90 = vector.shape_cast %89 : vector<1xf32> to vector<1x1xf32>
      %91 = vector.extract_strided_slice %85 {offsets = [2, 0], sizes = [1, 32], strides = [1, 1]} : vector<4x32xf32> to vector<1x32xf32>
      %92 = arith.mulf %86, %91 : vector<1x32xf32>
      %cst_30 = arith.constant dense<0.000000e+00> : vector<1xf32>
      %93 = vector.multi_reduction <add>, %92, %cst_30 [1] : vector<1x32xf32> to vector<1xf32>
      %94 = vector.shape_cast %93 : vector<1xf32> to vector<1x1xf32>
      %95 = arith.maximumf %90, %94 : vector<1x1xf32>
      %96 = vector.extract_strided_slice %85 {offsets = [3, 0], sizes = [1, 32], strides = [1, 1]} : vector<4x32xf32> to vector<1x32xf32>
      %97 = arith.mulf %86, %96 : vector<1x32xf32>
      %cst_31 = arith.constant dense<0.000000e+00> : vector<1xf32>
      %98 = vector.multi_reduction <add>, %97, %cst_31 [1] : vector<1x32xf32> to vector<1xf32>
      %99 = vector.shape_cast %98 : vector<1xf32> to vector<1x1xf32>
      %100 = arith.maximumf %95, %99 : vector<1x1xf32>
      %101 = arith.subf %90, %100 : vector<1x1xf32>
      %102 = math.exp %101 : vector<1x1xf32>
      %103 = arith.subf %94, %100 : vector<1x1xf32>
      %104 = math.exp %103 : vector<1x1xf32>
      %105 = arith.addf %102, %104 : vector<1x1xf32>
      %106 = arith.subf %99, %100 : vector<1x1xf32>
      %107 = math.exp %106 : vector<1x1xf32>
      %108 = arith.addf %105, %107 : vector<1x1xf32>
      %109 = math.log %108 : vector<1x1xf32>
      %110 = arith.addf %100, %109 : vector<1x1xf32>
      %111 = arith.subf %110, %90 : vector<1x1xf32>
      %112 = vector.shape_cast %111 : vector<1x1xf32> to vector<1x1x1xf32>
      %c0_32 = arith.constant 0 : index
      %c0_33 = arith.constant 0 : index
      %c0_34 = arith.constant 0 : index
      %113 = vector.load %arg7[%c0_32, %c0_33, %c0_34] : memref<1x1x1xf32, #tpu.memory_space<vmem>>, vector<1x1x1xf32>
      tpu.vector_store %arg7[%c0_32, %c0_33, %c0_34], %112 {strides = array<i32>} : memref<1x1x1xf32, #tpu.memory_space<vmem>>, vector<1x1x1xf32>,
    } else {
    }
    return
  }
  func.func @transform_0(%arg0: i32, %arg1: i32, %arg2: memref<8xi32, #tpu.memory_space<smem>>, %arg3: memref<8xi32, #tpu.memory_space<smem>>) -> (i32, i32, i32) {
    %c0_i32 = arith.constant 0 : i32
    %c0_i32_0 = arith.constant 0 : i32
    return %arg0, %c0_i32, %arg1 : i32, i32, i32
  }
  func.func @transform_1(%arg0: i32, %arg1: i32, %arg2: memref<8xi32, #tpu.memory_space<smem>>, %arg3: memref<8xi32, #tpu.memory_space<smem>>) -> (i32, i32) {
    %c0_i32 = arith.constant 0 : i32
    %c0_i32_0 = arith.constant 0 : i32
    %c0_i32_1 = arith.constant 0 : i32
    return %c0_i32, %c0_i32_0 : i32, i32
  }
  func.func @transform_2(%arg0: i32, %arg1: i32, %arg2: memref<8xi32, #tpu.memory_space<smem>>, %arg3: memref<8xi32, #tpu.memory_space<smem>>) -> (i32, i32) {
    %c0_i32 = arith.constant 0 : i32
    %c0_i32_0 = arith.constant 0 : i32
    %c0_i32_1 = arith.constant 0 : i32
    return %c0_i32, %c0_i32_0 : i32, i32
  }
  func.func @transform_3(%arg0: i32, %arg1: i32, %arg2: memref<8xi32, #tpu.memory_space<smem>>, %arg3: memref<8xi32, #tpu.memory_space<smem>>) -> (i32, i32, i32) {
    %c0_i32 = arith.constant 0 : i32
    %c0_i32_0 = arith.constant 0 : i32
    %c0_i32_1 = arith.constant 0 : i32
    return %arg0, %c0_i32, %c0_i32_0 : i32, i32, i32
  }
}

</mosaic_0001>

<llo_original>
// kernel: tpu_custom_call.1
$region0: #{tpu_custom_call.1}
  #allocation0 [shape = 'u32[]', space=smem, size = 0x4, offset = 0x4, fixed_abs, tag = 'smem constant byte address 0x4 - core index']
  #allocation1 [shape = 'u32[144,128]{1,0:T(1,128)}', space=vmem, size = 0x12000, scoped, tag = 'internal scratch']
  #allocation2 [shape = 'f32[4,4]{1,0:T(4,128)}', space=vmem, size = 0x800, scoped, tag = 'scratch operand']
  #allocation3 [shape = 's32[1]{0}', space=sflag, size = 0x4, scoped, tag = 'scoped memory for tpu_custom_call.1']
  #allocation4 [shape = 'u8[512]{0}', space=smem, size = 0x200, scoped, tag = 'prefetched SMEM operand 0']
  #allocation5 [shape = 'u8[512]{0}', space=smem, size = 0x200, scoped, tag = 'prefetched SMEM operand 1']
  %s0 = inlined_call_operand.vmem [shape: s32[8], index: 0, kind: input, shape index: {}]
  %s1 = inlined_call_operand.vmem [shape: s32[8], index: 1, kind: input, shape index: {}]
  %s2 = inlined_call_operand.vmem [shape: f32[2,12,256], index: 2, kind: input, shape index: {}]
  %s3 = inlined_call_operand.vmem [shape: f32[4,32], index: 3, kind: input, shape index: {}]
  %s4 = inlined_call_operand.vmem [shape: f32[1,32], index: 4, kind: input, shape index: {}]
  %s5 = inlined_call_operand.vmem [shape: f32[2,1,1], index: 5, kind: output, shape index: {}]
  %s6 = sld [smem:[#allocation0]]
  $region91: #{tpu_custom_call.1} parent=0
    _
  %s8 = ssub.s32 1, %s6
  %s9 = scalar_select 0, %s8, %s6
  %s10 = sshll.u32 %s0, 4
  %s11 = int_to_ptr.vmem [resolvable:$true] %s10
  %13 = dma.vmem_to_smem %s11, 16, [#allocation4], [#allocation3]
  %s14 = sshll.u32 %s1, 4
  %s15 = int_to_ptr.vmem [resolvable:$true] %s14
  %17 = dma.vmem_to_smem %s15, 16, [#allocation5], [#allocation3]
  %18 = dma.done [#allocation3], 32
  %19 = sfence
  $region1: #{tpu_custom_call.1} parent=0
    #allocation6 [shape = 'u8[16384]{0}', space=vmem, size = 0x4000, scoped, tag = 'input window, operand 2']
    loop: start=0, step=1, limit=6
    $region2: #{tpu_custom_call.1} parent=1 // loop_pre_header
      _
    $region3: #{tpu_custom_call.1} parent=1 // loop_header
      %s21 = sphi 0, %s25
      %p22 = scmp.ge.s32.totalorder %s21, 6
      %s28 = sphi 0, %s40
      %s29 = sphi 0, %s36
      %s30 = sphi 0, %s28
      %s31 = sphi 0, %s29
      %s32 = sphi 0, %s30
      %s33 = sphi 0, %s31
      %s45 = sphi 0, %s47
      %s48 = sphi 0, %s45
      %s49 = sphi 0, %s48
      %s65 = sphi 0, %s49
      %s69 = sphi 0, %s69
      %s71 = sphi 0, %s69
      %s72 = sphi 0, %s71
      %s86 = sphi 0, %s72
      %s90 = sphi 0, %s90
      %s92 = sphi 0, %s90
      %s93 = sphi 0, %s92
      %s107 = sphi 0, %s93
      %s113 = sphi 0, %s115
      %s116 = sphi 0, %s113
      %s117 = sphi 0, %s116
      %s133 = sphi 0, %s117
    $region4: #{tpu_custom_call.1} parent=1 // loop_header_branch
      %24 = sbr.rel (%p22) target = $region8
    $region5: #{tpu_custom_call.1} parent=1 // loop_body
      %s26 = ssub.s32 %s21, 1
      %s27 = ssub.s32 %s21, 2
      %s34 = sadd.s32 1, %s29
      %p35 = scmp.ge.s32.totalorder %s34, 2
      %s36 = scalar_select %p35, 0, %s34
      %s37 = sadd.s32 1, %s28
      %s38 = scalar_select %p35, %s37, %s28
      %p39 = scmp.ge.s32.totalorder %s38, 2
      %s40 = scalar_select %p39, 0, %s38
      %s41 = ssub.s32 %s28, %s40
      %s42 = ssub.s32 %s29, %s36
      %s43 = sor.u32 %s41, %s42
      %p44 = scmp.eq.s32.totalorder %s43, 0
      %s46 = sadd.s32 %s45, 1
      %s47 = scalar_select %p44, %s45, %s46
      %p50 = pneg %p44
      %p51 = scmp.eq.s32.totalorder %s21, 3
      %p52 = por %p50, %p51
      %p53 = scmp.ne.s32.totalorder %s45, %s48
      %p54 = scmp.eq.s32.totalorder %s21, 0
      %p55 = por %p53, %p54
      %p56 = scmp.ne.s32.totalorder %s45, %s48
      %p57 = scmp.eq.s32.totalorder %s26, 3
      %p58 = por %p56, %p57
      %p59 = scmp.ne.s32.totalorder %s48, %s49
      %p60 = scmp.eq.s32.totalorder %s26, 0
      %p61 = por %p59, %p60
      %p62 = scmp.ne.s32.totalorder %s48, %s49
      %p63 = scmp.eq.s32.totalorder %s27, 3
      %p64 = por %p62, %p63
      %p66 = scmp.ne.s32.totalorder %s49, %s65
      %p67 = scmp.eq.s32.totalorder %s27, 0
      %p68 = por %p66, %p67
      %s70 = sadd.s32 %s69, 1
      %p73 = scmp.eq.s32.totalorder %s21, 3
      %p74 = scmp.ne.s32.totalorder %s69, %s71
      %p75 = scmp.eq.s32.totalorder %s21, 0
      %p76 = por %p74, %p75
      %p77 = scmp.ne.s32.totalorder %s69, %s71
      %p78 = scmp.eq.s32.totalorder %s26, 3
      %p79 = por %p77, %p78
      %p80 = scmp.ne.s32.totalorder %s71, %s72
      %p81 = scmp.eq.s32.totalorder %s26, 0
      %p82 = por %p80, %p81
      %p83 = scmp.ne.s32.totalorder %s71, %s72
      %p84 = scmp.eq.s32.totalorder %s27, 3
      %p85 = por %p83, %p84
      %p87 = scmp.ne.s32.totalorder %s72, %s86
      %p88 = scmp.eq.s32.totalorder %s27, 0
      %p89 = por %p87, %p88
      %s91 = sadd.s32 %s90, 1
      %p94 = scmp.eq.s32.totalorder %s21, 3
      %p95 = scmp.ne.s32.totalorder %s90, %s92
      %p96 = scmp.eq.s32.totalorder %s21, 0
      %p97 = por %p95, %p96
      %p98 = scmp.ne.s32.totalorder %s90, %s92
      %p99 = scmp.eq.s32.totalorder %s26, 3
      %p100 = por %p98, %p99
      %p101 = scmp.ne.s32.totalorder %s92, %s93
      %p102 = scmp.eq.s32.totalorder %s26, 0
      %p103 = por %p101, %p102
      %p104 = scmp.ne.s32.totalorder %s92, %s93
      %p105 = scmp.eq.s32.totalorder %s27, 3
      %p106 = por %p104, %p105
      %p108 = scmp.ne.s32.totalorder %s93, %s107
      %p109 = scmp.eq.s32.totalorder %s27, 0
      %p110 = por %p108, %p109
      %s111 = ssub.s32 %s28, %s40
      %p112 = scmp.eq.s32.totalorder %s111, 0
      %s114 = sadd.s32 %s113, 1
      %s115 = scalar_select %p112, %s113, %s114
      %p118 = pneg %p112
      %p119 = scmp.eq.s32.totalorder %s21, 3
      %p120 = por %p118, %p119
      %p121 = scmp.ne.s32.totalorder %s113, %s116
      %p122 = scmp.eq.s32.totalorder %s21, 0
      %p123 = por %p121, %p122
      %p124 = scmp.ne.s32.totalorder %s113, %s116
      %p125 = scmp.eq.s32.totalorder %s26, 3
      %p126 = por %p124, %p125
      %p127 = scmp.ne.s32.totalorder %s116, %s117
      %p128 = scmp.eq.s32.totalorder %s26, 0
      %p129 = por %p127, %p128
      %p130 = scmp.ne.s32.totalorder %s116, %s117
      %p131 = scmp.eq.s32.totalorder %s27, 3
      %p132 = por %p130, %p131
      %p134 = scmp.ne.s32.totalorder %s117, %s133
      %p135 = scmp.eq.s32.totalorder %s27, 0
      %p136 = por %p134, %p135
      %p137 = scmp.le.s32.totalorder 1, %s21
      %p138 = scmp.lt.s32.totalorder %s21, 5
      %p139 = pnand %p137, %p138
      %p140 = pneg %p139
      // Predicated region
      $region9: #{tpu_custom_call.1} parent=5 // pred_check
        _
      $region10: #{tpu_custom_call.1} parent=5 // pred_check_branch
        %142 = sbr.rel (%p139) target = $region12
      $region11: #{tpu_custom_call.1} parent=5 // pred_region
        %s143 = ssub.s32 %s21, 1
        // Predicated region
        $region13: #{tpu_custom_call.1} parent=11 // pred_check
          %p144 = pneg %p82
        $region14: #{tpu_custom_call.1} parent=11 // pred_check_branch
          %146 = sbr.rel (%p144) target = $region16
        $region15: #{tpu_custom_call.1} parent=11 // pred_region
          _
        $region16: #{tpu_custom_call.1} parent=11 // pred_fallthru
          _
        // Predicated region
        $region17: #{tpu_custom_call.1} parent=11 // pred_check
          %p147 = pneg %p103
        $region18: #{tpu_custom_call.1} parent=11 // pred_check_branch
          %149 = sbr.rel (%p147) target = $region20
        $region19: #{tpu_custom_call.1} parent=11 // pred_region
          _
        $region20: #{tpu_custom_call.1} parent=11 // pred_fallthru
          _
      $region12: #{tpu_custom_call.1} parent=5 // pred_fallthru
        _
      %p150 = scmp.lt.s32.totalorder %s21, 4
      // Predicated region
      $region21: #{tpu_custom_call.1} parent=5 // pred_check
        %p151 = pneg %p150
      $region22: #{tpu_custom_call.1} parent=5 // pred_check_branch
        %153 = sbr.rel (%p151) target = $region24
      $region23: #{tpu_custom_call.1} parent=5 // pred_region
        // Predicated region
        $region25: #{tpu_custom_call.1} parent=23 // pred_check
          %p154 = pneg %p55
        $region26: #{tpu_custom_call.1} parent=23 // pred_check_branch
          %156 = sbr.rel (%p154) target = $region28
        $region27: #{tpu_custom_call.1} parent=23 // pred_region
          %s157 = sand.u32 %s45, 1
          %s158 = sand.u32 %s45, 1
          %s159 = smul.addr %s158, 16
          %s160 = scalar_lea.vmem [#allocation6], %s159
          %s161 = smul.addr %s28, 4
          %s162 = sadd.s32 %s29, %s161
          %s163 = smul.addr %s162, 8
          %s164 = scalar_lea.vmem %s2, %s163
          // Predicated region
          $region29: #{tpu_custom_call.1} parent=27 // pred_check
            _
          $region30: #{tpu_custom_call.1} parent=27 // pred_check_branch
            %166 = sbr.rel (0) target = $region32
          $region31: #{tpu_custom_call.1} parent=27 // pred_region
            // Predicated region
            $region33: #{tpu_custom_call.1} parent=31 // pred_check
              _
            $region34: #{tpu_custom_call.1} parent=31 // pred_check_branch
              %168 = sbr.rel (0) target = $region36
            $region35: #{tpu_custom_call.1} parent=31 // pred_region
              // Predicated region
              $region48: #{tpu_custom_call.1} parent=35 // pred_check
                _
              $region49: #{tpu_custom_call.1} parent=35 // pred_check_branch
                %185 = sbr.rel (0) target = $region51
              $region50: #{tpu_custom_call.1} parent=35 // pred_region
                loop: start=0, step=1, limit=1
                $region52: #{tpu_custom_call.1} parent=50 // loop_pre_header
                  _
                $region53: #{tpu_custom_call.1} parent=50 // loop_header
                  %s187 = sphi 0, %s191
                  %p188 = scmp.ge.s32.totalorder %s187, 1
                  %s192 = sphi %s164, %s164
                  %s193 = sphi %s160, %s160
                $region54: #{tpu_custom_call.1} parent=50 // loop_header_branch
                  %190 = sbr.rel (%p188) target = $region58
                $region55: #{tpu_custom_call.1} parent=50 // loop_body
                  %v194 = vld [vmem:[%s192] sm:$0xff]
                  %195 = vst [vmem:[%s193] sm:$0xff] %v194
                  %v196 = vld [vmem:[%s192 + $0x10] sm:$0xff]
                  %197 = vst [vmem:[%s193 + $0x8] sm:$0xff] %v196
                $region56: #{tpu_custom_call.1} parent=50 // loop_footer
                  %s191 = sadd.s32 1, %s187
                $region57: #{tpu_custom_call.1} parent=50 // loop_footer_branch
                  %186 = sbr.rel target = $region53
                $region58: #{tpu_custom_call.1} parent=50 // loop_exit
                  _
              $region51: #{tpu_custom_call.1} parent=35 // pred_fallthru
                _
              // Predicated region
              $region59: #{tpu_custom_call.1} parent=35 // pred_check
                _
              $region60: #{tpu_custom_call.1} parent=35 // pred_check_branch
                %199 = sbr.rel target = $region62
              $region61: #{tpu_custom_call.1} parent=35 // pred_region
                _
              $region62: #{tpu_custom_call.1} parent=35 // pred_fallthru
                _
            $region36: #{tpu_custom_call.1} parent=31 // pred_fallthru
              _
            // Predicated region
            $region37: #{tpu_custom_call.1} parent=31 // pred_check
              _
            $region38: #{tpu_custom_call.1} parent=31 // pred_check_branch
              %170 = sbr.rel target = $region40
            $region39: #{tpu_custom_call.1} parent=31 // pred_region
              loop: start=0, step=1, limit=1
              $region41: #{tpu_custom_call.1} parent=39 // loop_pre_header
                _
              $region42: #{tpu_custom_call.1} parent=39 // loop_header
                %s173 = sphi 0, %s177
                %p174 = scmp.ge.s32.totalorder %s173, 1
                %s178 = sphi %s164, %s164
                %s179 = sphi %s160, %s160
              $region43: #{tpu_custom_call.1} parent=39 // loop_header_branch
                %176 = sbr.rel (%p174) target = $region47
              $region44: #{tpu_custom_call.1} parent=39 // loop_body
                %v180 = vld [vmem:[%s178] sm:$0xff]
                %181 = vst [vmem:[%s179] sm:$0xff] %v180
                %v182 = vld [vmem:[%s178 + $0x10] sm:$0xff]
                %183 = vst [vmem:[%s179 + $0x8] sm:$0xff] %v182
              $region45: #{tpu_custom_call.1} parent=39 // loop_footer
                %s177 = sadd.s32 1, %s173
              $region46: #{tpu_custom_call.1} parent=39 // loop_footer_branch
                %172 = sbr.rel target = $region42
              $region47: #{tpu_custom_call.1} parent=39 // loop_exit
                _
            $region40: #{tpu_custom_call.1} parent=31 // pred_fallthru
              _
          $region32: #{tpu_custom_call.1} parent=27 // pred_fallthru
            _
          %200 = vnop
        $region28: #{tpu_custom_call.1} parent=23 // pred_fallthru
          _
      $region24: #{tpu_custom_call.1} parent=5 // pred_fallthru
        _
      %p201 = scmp.le.s32.totalorder 1, %s21
      %p202 = scmp.lt.s32.totalorder %s21, 5
      %p203 = pnand %p201, %p202
      %p204 = pneg %p203
      // Predicated region
      $region63: #{tpu_custom_call.1} parent=5 // pred_check
        _
      $region64: #{tpu_custom_call.1} parent=5 // pred_check_branch
        %206 = sbr.rel (%p203) target = $region66
      $region65: #{tpu_custom_call.1} parent=5 // pred_region
        %s207 = ssub.s32 %s21, 1
        %s208 = sand.u32 %s48, 1
        %s209 = sand.u32 %s48, 1
        %s210 = smul.addr %s209, 16
        %s211 = scalar_lea.vmem [#allocation6], %s210
        // Predicated region
        $region67: #{tpu_custom_call.1} parent=65 // pred_check
          %p212 = pneg %p61
        $region68: #{tpu_custom_call.1} parent=65 // pred_check_branch
          %214 = sbr.rel (%p212) target = $region70
        $region69: #{tpu_custom_call.1} parent=65 // pred_region
          _
        $region70: #{tpu_custom_call.1} parent=65 // pred_fallthru
          _
        %s215 = sand.u32 %s48, 1
        %s216 = sand.u32 %s48, 1
        %s217 = smul.addr %s216, 16
        %s218 = scalar_lea.vmem [#allocation6], %s217
        %p219 = pneg %p61
        %p220 = pneg %p58
        %p221 = pneg %p82
        %p222 = pneg %p79
        %p223 = pneg %p103
        %p224 = pneg %p100
        %p225 = pneg %p129
        %p226 = pneg %p126
        %p227 = scmp.lt.s32.totalorder %s30, 1
        %s228 = scalar_select %p227, %s30, 1
        %s229 = scalar_lea.vmem %s5, %s228
        %p230 = scmp.lt.s32.totalorder %s30, 1
        %s231 = scalar_select %p230, %s30, 1
        %s232 = scalar_lea.vmem %s5, %s231
        %p233 = scmp.eq.s32.totalorder %s31, 0
        // Predicated region
        $region71: #{tpu_custom_call.1} parent=65 // pred_check
          %p234 = pneg %p233
        $region72: #{tpu_custom_call.1} parent=65 // pred_check_branch
          %236 = sbr.rel (%p234) target = $region74
        $region73: #{tpu_custom_call.1} parent=65 // pred_region
          %vm237 = vcmask 27648
          %238 = vst.msk [vmem:[#allocation2] sm:$0xf] %vm237, 0.0
        $region74: #{tpu_custom_call.1} parent=65 // pred_fallthru
          _
        %s239 = smul.u32 %s30, 4
        %s240 = sld [smem:[#allocation4 + %s239]]
        %v241 = vstv %s240
        %s242 = sadd.s32 %s239, 1
        %s243 = sld [smem:[#allocation4 + %s242]]
        %v244 = vstv %s243
        %s245 = sadd.s32 %s239, 2
        %s246 = sld [smem:[#allocation4 + %s245]]
        %v247 = vstv %s246
        %s248 = sadd.s32 %s239, 3
        %s249 = sld [smem:[#allocation4 + %s248]]
        %v250 = vstv %s249
        %vm251 = vcmask 1040384
        %v252 = vsel %vm251, %v241, %v244
        %vm253 = vcmask 1041408
        %v254 = vsel %vm253, %v252, %v247
        %vm255 = vcmask 1042432
        %v256 = vsel %vm255, %v254, %v250
        %s257 = sld [smem:[#allocation5 + %s239]]
        %v258 = vstv %s257
        %s259 = sld [smem:[#allocation5 + %s242]]
        %v260 = vstv %s259
        %s261 = sld [smem:[#allocation5 + %s245]]
        %v262 = vstv %s261
        %s263 = sld [smem:[#allocation5 + %s248]]
        %v264 = vstv %s263
        %v265 = vsel %vm251, %v258, %v260
        %v266 = vsel %vm253, %v265, %v262
        %v267 = vsel %vm255, %v266, %v264
        %v268 = vlaneseq
        %v269 = vand.u32 %v268, 127
        %s270 = smul.u32 %s31, 128
        %v271 = vstv %s270
        %v272 = vadd.s32 %v269, %v271
        %273 = vset.pattern.permute.xlu0 0
        %274 = vperm.xlu0 %273, %v256
        %v275 = vpop.permute.xlu0 %274
        %vm276 = vcmp.ge.s32.totalorder %v272, %v275
        %277 = vset.pattern.permute.xlu0 0
        %278 = vperm.xlu0 %277, %v267
        %v279 = vpop.permute.xlu0 %278
        %vm280 = vcmp.lt.s32.totalorder %v272, %v279
        %vm281 = vmand %vm276, %vm280
        %v282 = vld [vmem:[%s211] sm:$0xff]
        %v283 = vld [vmem:[%s211 + $0x8] sm:$0xf]
        %v285 = vrot.slane %v282, 4
        %v287 = vsel %vm281, 1, 0
        %v289 = vunpack.c.l.s4 1966171168
        %v290 = vunpack.c.0.s8 %v289
        %v291 = vlaneseq
        %v292 = vshrl.u32 %v291, 7
        %v293 = vsub.s32 %v290, %v292
        %v294 = vrot.slane %v287, %v293
        %v295 = vcombine.high %v294, %v294
        %v297 = vunpack.c.l.s4 1966171168
        %v298 = vunpack.c.0.s8 %v297
        %v299 = vlaneseq
        %v300 = vshrl.u32 %v299, 7
        %v301 = vsub.s32 %v298, %v300
        %v302 = vrot.slane %v294, %v301
        %v304 = vunpack.c.l.s4 1966171168
        %v305 = vunpack.c.0.s8 %v304
        %v306 = vlaneseq
        %v307 = vshrl.u32 %v306, 7
        %v308 = vsub.s32 %v305, %v307
        %v309 = vrot.slane %v295, %v308
        %v310 = vcombine.high %v302, %v302
        %v311 = vcombine.high %v309, %v309
        %vm312 = vcmp.ne.s32.totalorder %v302, 0
        %vm313 = vcmp.ne.s32.totalorder %v309, 0
        %vm314 = vcmp.ne.s32.totalorder %v310, 0
        %vm315 = vcmp.ne.s32.totalorder %v311, 0
        %v316 = vsel %vm312, 1, 0
        %v317 = vsel %vm313, 1, 0
        %v318 = vsel %vm314, 1, 0
        %v319 = vsel %vm315, 1, 0
        %v320 = vlaneseq
        %v321 = vshrl.u32 %v320, 7
        %v322 = vsub.s32 0, %v321
        %v323 = vrot.slane %v316, %v322
        %v324 = vlaneseq
        %v325 = vshrl.u32 %v324, 7
        %v326 = vsub.s32 0, %v325
        %v327 = vrot.slane %v317, %v326
        %v328 = vlaneseq
        %v329 = vshrl.u32 %v328, 7
        %v330 = vsub.s32 0, %v329
        %v331 = vrot.slane %v318, %v330
        %v332 = vlaneseq
        %v333 = vshrl.u32 %v332, 7
        %v334 = vsub.s32 0, %v333
        %v335 = vrot.slane %v319, %v334
        %vm336 = vcmp.eq.s32.totalorder %v323, 1
        %vm337 = vcmp.eq.s32.totalorder %v327, 1
        %vm338 = vcmp.eq.s32.totalorder %v331, 1
        %vm339 = vcmp.eq.s32.totalorder %v335, 1
        %v340 = vsel %vm336, %v282, 0.0
        %v341 = vsel %vm337, %v282, 0.0
        %v342 = vsel %vm338, %v285, 0.0
        %v343 = vsel %vm339, %v283, 0.0
        %v344 = vld [vmem:[#allocation2] sm:$0xf]
        %vm345 = vcmask 1043456
        %v346 = vsel %vm345, %v340, 0.0
        %347 = vadd.xlane.f32.xlu0 %v346
        %v348 = vpop.xlane.xlu0 %347
        %v349 = vsel %vm345, %v341, 0.0
        %350 = vadd.xlane.f32.xlu0 %v349
        %v351 = vpop.xlane.xlu0 %350
        %v352 = vsel %vm345, %v342, 0.0
        %353 = vadd.xlane.f32.xlu0 %v352
        %v354 = vpop.xlane.xlu0 %353
        %v355 = vsel %vm345, %v343, 0.0
        %356 = vadd.xlane.f32.xlu0 %v355
        %v357 = vpop.xlane.xlu0 %356
        %v362 = vlaneseq
        %v363 = vshrl.u32 %v362, 7
        %v364 = vsub.s32 %v269, %v363
        %v365 = vrot.slane %v348, %v364
        %v366 = vlaneseq
        %v367 = vshrl.u32 %v366, 7
        %v368 = vsub.s32 %v269, %v367
        %v369 = vrot.slane %v351, %v368
        %v370 = vlaneseq
        %v371 = vshrl.u32 %v370, 7
        %v372 = vsub.s32 %v269, %v371
        %v373 = vrot.slane %v354, %v372
        %v374 = vlaneseq
        %v375 = vshrl.u32 %v374, 7
        %v376 = vsub.s32 %v269, %v375
        %v377 = vrot.slane %v357, %v376
        %vm378 = vcmask 1041409
        %v379 = vsel %vm378, %v369, %v365
        %vm380 = vcmask 1042434
        %v381 = vsel %vm380, %v373, %v379
        %vm382 = vcmask 1043459
        %v383 = vsel %vm382, %v377, %v381
        %v385 = vadd.f32 %v344, %v383
        %vm386 = vcmask 27648
        %387 = vst.msk [vmem:[#allocation2] sm:$0xf] %vm386, %v385
        %p388 = scmp.eq.s32.totalorder %s31, 1
        // Predicated region
        $region75: #{tpu_custom_call.1} parent=65 // pred_check
          %p389 = pneg %p388
        $region76: #{tpu_custom_call.1} parent=65 // pred_check_branch
          %391 = sbr.rel (%p389) target = $region78
        $region77: #{tpu_custom_call.1} parent=65 // pred_region
          %v392 = vsub.s32 %v267, %v256
          %v393 = vcvt.s32.f32 %v392
          %v394 = vld [vmem:[#allocation2] sm:$0xf]
          %396 = vset.pattern.permute.xlu0 0
          %397 = vperm.xlu0 %396, %v393
          %v398 = vpop.permute.xlu0 %397
          %v400 = vrcp.pop %v398
          %v401 = vmul.f32 %v394, %v400
          %v402 = vld [vmem:[%s3] sm:$0xf]
          %v403 = vld [vmem:[%s4] sm:$0x1]
          %v405 = vlaneseq
          %v406 = vshrl.u32 %v405, 7
          %v407 = vsub.s32 0, %v406
          %v408 = vrot.slane %v403, %v407
          %vm410 = vcmask 31744
          %v412 = vsel %vm410, %v401, 0
          %v415 = vsel %vm345, %v402, 0
          %417 = vmatprep.subr.mxu0 0.0
          %418 = vmatpush1.msra.mxu0 %v415
          %419 = vmatprep.subr.mxu0 0.0
          %420 = vmatpush1.msra.mxu0 0.0
          %421 = vmatprep.subr.mxu0 0.0
          %422 = vmatpush1.msra.mxu0 0.0
          %423 = vmatprep.subr.mxu0 0.0
          %424 = vmatpush1.msra.mxu0 0.0
          %425 = vmatprep.subr.mxu0 0.0
          %426 = vmatpush1.msra.mxu0 0.0
          %427 = vmatprep.subr.mxu0 0.0
          %428 = vmatpush1.msra.mxu0 0.0
          %429 = vmatprep.subr.mxu0 0.0
          %430 = vmatpush1.msra.mxu0 0.0
          %431 = vmatprep.subr.mxu0 0.0
          %432 = vmatpush1.msra.mxu0 0.0
          %433 = vmatprep.subr.mxu0 0.0
          %434 = vmatpush1.msra.mxu0 0.0
          %435 = vmatprep.subr.mxu0 0.0
          %436 = vmatpush1.msra.mxu0 0.0
          %437 = vmatprep.subr.mxu0 0.0
          %438 = vmatpush1.msra.mxu0 0.0
          %439 = vmatprep.subr.mxu0 0.0
          %440 = vmatpush1.msra.mxu0 0.0
          %441 = vmatprep.subr.mxu0 0.0
          %442 = vmatpush1.msra.mxu0 0.0
          %443 = vmatprep.subr.mxu0 0.0
          %444 = vmatpush1.msra.mxu0 0.0
          %445 = vmatprep.subr.mxu0 0.0
          %446 = vmatpush1.msra.mxu0 0.0
          %447 = vmatprep.subr.mxu0 0.0
          %448 = vmatpush1.msra.mxu0 0.0
          %449 = vmatprep.subr.mxu0 0.0
          %450 = vmatpush1.msra.mxu0 0.0
          %451 = vmatprep.subr.mxu0 0.0
          %452 = vmatpush1.msra.mxu0 0.0
          %453 = vmatprep.subr.mxu0 0.0
          %454 = vmatpush1.msra.mxu0 0.0
          %455 = vmatprep.subr.mxu0 0.0
          %456 = vmatpush1.msra.mxu0 0.0
          %457 = vmatprep.subr.mxu0 0.0
          %458 = vmatpush1.msra.mxu0 0.0
          %459 = vmatprep.subr.mxu0 0.0
          %460 = vmatpush1.msra.mxu0 0.0
          %461 = vmatprep.subr.mxu0 0.0
          %462 = vmatpush1.msra.mxu0 0.0
          %463 = vmatprep.subr.mxu0 0.0
          %464 = vmatpush1.msra.mxu0 0.0
          %465 = vmatprep.subr.mxu0 0.0
          %466 = vmatpush1.msra.mxu0 0.0
          %467 = vmatprep.subr.mxu0 0.0
          %468 = vmatpush1.msra.mxu0 0.0
          %469 = vmatprep.subr.mxu0 0.0
          %470 = vmatpush1.msra.mxu0 0.0
          %471 = vmatprep.subr.mxu0 0.0
          %472 = vmatpush1.msra.mxu0 0.0
          %473 = vmatprep.subr.mxu0 0.0
          %474 = vmatpush1.msra.mxu0 0.0
          %475 = vmatprep.subr.mxu0 0.0
          %476 = vmatpush1.msra.mxu0 0.0
          %477 = vmatprep.subr.mxu0 0.0
          %478 = vmatpush1.msra.mxu0 0.0
          %479 = vmatprep.subr.mxu0 0.0
          %480 = vmatpush1.msra.mxu0 0.0
          %481 = vmatprep.mubr.f32.mxu0 0.0
          %482 = vmatmul.mubr.f32.gmra.mrb[0].mxu0 %v412
          %v483 = vpop.f32.mrb[0].mxu0
          %v484 = vadd.f32 %v408, %v483
          %v485 = vpop.f32.mrb[0].mxu0
          %486 = vdwg.mxu0
          %v488 = vrot.slane %v484, 1
          %v490 = vmul.f32 %v484, %v488
          %vm491 = vcmask 253952
          %v492 = vsel %vm491, %v490, 0.0
          %493 = vadd.xlane.f32.xlu0 %v492
          %v494 = vpop.xlane.xlu0 %493
          %v495 = vrot.slane %v484, 2
          %v497 = vmul.f32 %v484, %v495
          %v498 = vsel %vm491, %v497, 0.0
          %499 = vadd.xlane.f32.xlu0 %v498
          %v500 = vpop.xlane.xlu0 %499
          %v501 = vmax.f32 %v494, %v500
          %v502 = vrot.slane %v484, 3
          %v504 = vmul.f32 %v484, %v502
          %v505 = vsel %vm491, %v504, 0.0
          %506 = vadd.xlane.f32.xlu0 %v505
          %v507 = vpop.xlane.xlu0 %506
          %v508 = vmax.f32 %v501, %v507
          %v509 = vsub.f32 %v494, %v508
          %v510 = vmul.f32 %v509, 1.442695
          %v511 = vpow.pop %v510
          %v512 = vsub.f32 %v500, %v508
          %v513 = vmul.f32 %v512, 1.442695
          %v514 = vpow.pop %v513
          %v515 = vadd.f32 %v511, %v514
          %v516 = vsub.f32 %v507, %v508
          %v517 = vmul.f32 %v516, 1.442695
          %v518 = vpow.pop %v517
          %v519 = vadd.f32 %v515, %v518
          %v520 = vlog2.pop %v519
          %v521 = vmul.f32 %v520, 0.6931472
          %v522 = vadd.f32 %v508, %v521
          %v523 = vsub.f32 %v522, %v494
          %vm524 = vcmask 0
          %525 = vst.msk [vmem:[%s232] sm:$0x1] %vm524, %v523
        $region78: #{tpu_custom_call.1} parent=65 // pred_fallthru
          _
        %p526 = scmp.lt.s32.totalorder %s30, 1
        %s527 = scalar_select %p526, %s30, 1
        %s528 = scalar_lea.vmem %s5, %s527
        // Predicated region
        $region79: #{tpu_custom_call.1} parent=65 // pred_check
          %p529 = pneg %p126
        $region80: #{tpu_custom_call.1} parent=65 // pred_check_branch
          %531 = sbr.rel (%p529) target = $region82
        $region81: #{tpu_custom_call.1} parent=65 // pred_region
          _
        $region82: #{tpu_custom_call.1} parent=65 // pred_fallthru
          _
      $region66: #{tpu_custom_call.1} parent=5 // pred_fallthru
        _
      %p532 = scmp.le.s32.totalorder 2, %s21
      // Predicated region
      $region83: #{tpu_custom_call.1} parent=5 // pred_check
        %p533 = pneg %p532
      $region84: #{tpu_custom_call.1} parent=5 // pred_check_branch
        %535 = sbr.rel (%p533) target = $region86
      $region85: #{tpu_custom_call.1} parent=5 // pred_region
        %s536 = ssub.s32 %s21, 2
        // Predicated region
        $region87: #{tpu_custom_call.1} parent=85 // pred_check
          %p537 = pneg %p132
        $region88: #{tpu_custom_call.1} parent=85 // pred_check_branch
          %539 = sbr.rel (%p537) target = $region90
        $region89: #{tpu_custom_call.1} parent=85 // pred_region
          %p540 = scmp.lt.s32.totalorder %s32, 1
          %s541 = scalar_select %p540, %s32, 1
          %s542 = scalar_lea.vmem %s5, %s541
        $region90: #{tpu_custom_call.1} parent=85 // pred_fallthru
          _
      $region86: #{tpu_custom_call.1} parent=5 // pred_fallthru
        _
    $region6: #{tpu_custom_call.1} parent=1 // loop_footer
      %s25 = sadd.s32 1, %s21
    $region7: #{tpu_custom_call.1} parent=1 // loop_footer_branch
      %20 = sbr.rel target = $region3
    $region8: #{tpu_custom_call.1} parent=1 // loop_exit
      _

</llo_original>
